<compile_context>
chip_gen: v7x
topology: tpu7x:2x2x1
jax: 0.10.0
libtpu: 0.0.40
codegen_flags: <defaults>
</compile_context>

<pallas_src>
import math

import jax
import jax.numpy as jnp
from jax.experimental import pallas as pl
from jax.experimental.pallas import tpu as pltpu


_TM_MAX = 2048                 # max (packed) rows per grid step
_WEIGHT_VMEM_BYTES = 4 << 20   # max single-buffer weight tile before OC tiling
_TILE_BUDGET_BYTES = 16 << 20  # budget for double-buffered x/out tiles (+weight)


def _round_up(x, m):
    return ((x + m - 1) // m) * m


def _tpu_cores_per_chip():
    """TensorCores per chip (v7x = 2, older = 1); best-effort detection."""
    try:
        kind = jax.devices()[0].device_kind.lower()
    except Exception:
        return 1
    return 2 if ("v7" in kind or "7x" in kind) else 1


def _choose_tn(k, oc, w_itemsize):
    """Output-column tile: full OC if the weight fits comfortably in VMEM,
    otherwise a 128-multiple bounding the weight block (2D grid kicks in)."""
    if k * oc * w_itemsize <= _WEIGHT_VMEM_BYTES:
        return oc
    tn = (_WEIGHT_VMEM_BYTES // (k * w_itemsize)) // 128 * 128
    tn = max(128, tn)
    return min(tn, oc)


def _choose_tm(rows, k, tn, in_itemsize, out_itemsize, cores):
    """Row tile: multiple of 8, as large as the VMEM budget / _TM_MAX allow.
    On 2-TC chips (v7x) keep >= 2 blocks per core, but never below 512 rows.
    No divisibility requirement: the last block is ragged and masked."""
    w_bytes = 2 * (k * tn * in_itemsize + tn * out_itemsize)  # dbl-buffered W + bias
    budget = max(_TILE_BUDGET_BYTES - w_bytes, 1 << 20)
    per_row = 2 * (k * in_itemsize + tn * out_itemsize)       # dbl-buffered x + out
    cap = max(8, (budget // max(per_row, 1)) // 8 * 8)
    tm = min(_TM_MAX, cap, _round_up(rows, 8))
    if cores > 1:
        while tm > 512 and pl.cdiv(rows, tm) < 2 * cores:
            tm = max(512, (tm // 2) // 8 * 8)
    return tm


def _linear_kernel(x_ref, w_ref, b_ref, o_ref):
    # x_ref: (tm, K), w_ref: (K, tn), b_ref: (1, tn), o_ref: (tm, tn)
    acc = jnp.dot(x_ref[...], w_ref[...], preferred_element_type=jnp.float32)
    o_ref[...] = (acc + b_ref[...]).astype(o_ref.dtype)


def _pallas_linear(x2d, weight, bias2d, out_dtype, *, tm, tn, vmem_limit, cost):
    """y = x2d @ weight + bias on a 2D (row, oc) grid; ragged last blocks masked."""
    rows, k = x2d.shape
    oc = weight.shape[1]
    grid = (pl.cdiv(rows, tm), pl.cdiv(oc, tn))
    return pl.pallas_call(
        _linear_kernel,
        out_shape=jax.ShapeDtypeStruct((rows, oc), out_dtype),
        grid=grid,
        in_specs=[
            pl.BlockSpec((tm, k), lambda i, j: (i, 0)),
            pl.BlockSpec((k, tn), lambda i, j: (0, j)),   # re-DMA'd only when j changes
            pl.BlockSpec((1, tn), lambda i, j: (0, j)),
        ],
        out_specs=pl.BlockSpec((tm, tn), lambda i, j: (i, j)),
        compiler_params=pltpu.CompilerParams(
            dimension_semantics=("parallel", "parallel"),
            vmem_limit_bytes=vmem_limit,
        ),
        cost_estimate=cost,
    )(x2d, weight, bias2d)


class PreExtractedFeatures:
    """JAX/Pallas port of PreExtactedFeatures."""

    def __init__(self, feature_dim, output_dim, key=None, dtype=jnp.float32,
                 use_bf16=False, min_rows_for_pallas=0):
        self.feature_dim = feature_dim
        self.output_dim = output_dim
        self.reduce_dim = feature_dim != output_dim
        self.use_bf16 = use_bf16
        # Below this flattened row count a plain jnp.dot beats a pallas_call
        # launch; default 0 keeps the Pallas path always-on for testing.
        self.min_rows_for_pallas = min_rows_for_pallas

        if not self.reduce_dim:
            return

        self._cores = _tpu_cores_per_chip()
        # v7x: 64 MiB physical VMEM -> 32 MiB scoped; v5e/v6e: 128 MiB -> 48 MiB.
        self._vmem_limit = (32 << 20) if self._cores > 1 else (48 << 20)

        if key is None:
            key = jax.random.PRNGKey(42)
        kw, kb = jax.random.split(key)
        # nn.Linear-style uniform(-1/sqrt(in), 1/sqrt(in)) init; weight stored
        # already transposed as (IC, OC), always kept in f32 as the reference.
        bound = 1.0 / (feature_dim ** 0.5)
        self.weight_t = jax.random.uniform(
            kw, (feature_dim, output_dim), jnp.float32, minval=-bound, maxval=bound)
        self.bias = jax.random.uniform(
            kb, (output_dim,), jnp.float32, minval=-bound, maxval=bound)

        compute_dtype = jnp.bfloat16 if use_bf16 else dtype
        self._compute_dtype = compute_dtype
        w_itemsize = jnp.dtype(compute_dtype).itemsize

        # Lane-dense output packing: fuse `pack` rows per kernel row via a
        # block-diagonal kron(I_pack, W) weight, but only when the packed
        # output width hits an exact multiple of 128 lanes (unmasked vst) and
        # the flop/weight inflation stays small.
        pack = 1
        if output_dim < 128:
            cand = 128 // math.gcd(128, output_dim)  # smallest pack reaching a 128-multiple
            max_pack = 8 if use_bf16 else 4
            if 1 < cand <= max_pack and \
               (cand * feature_dim) * (cand * output_dim) * w_itemsize <= _WEIGHT_VMEM_BYTES:
                pack = cand
        self.pack = pack

        self._w1 = self.weight_t.astype(compute_dtype)
        self._b1 = self.bias.reshape(1, output_dim)            # bias stays f32
        if pack > 1:
            eye = jnp.eye(pack, dtype=jnp.float32)
            self._wp = jnp.kron(eye, self.weight_t).astype(compute_dtype)
            self._bp = jnp.tile(self.bias, pack).reshape(1, pack * output_dim)
        else:
            self._wp, self._bp = self._w1, self._b1

    def _pallas_forward(self, x2d):
        n, ic = x2d.shape
        out_dtype = x2d.dtype
        oc = self.output_dim

        # Packing requires n % pack == 0; otherwise run unpacked (no padding,
        # no output slicing -> zero extra HBM passes either way).
        pack = self.pack if (self.pack > 1 and n % self.pack == 0) else 1
        rows = n // pack
        if rows < 8:
            # tiny batch: a pallas_call launch is not worth it
            return (x2d @ self.weight_t + self.bias).astype(out_dtype)

        if pack > 1:
            w, b = self._wp, self._bp
            xk = x2d.reshape(rows, pack * ic)   # free row-major view
        else:
            w, b = self._w1, self._b1
            xk = x2d

        if self.use_bf16:
            xk = xk.astype(jnp.bfloat16)

        k = xk.shape[1]
        oc_p = w.shape[1]
        in_itemsize = jnp.dtype(xk.dtype).itemsize
        w_itemsize = jnp.dtype(w.dtype).itemsize
        out_itemsize = jnp.dtype(out_dtype).itemsize

        tn = _choose_tn(k, oc_p, w_itemsize)
        tm = _choose_tm(rows, k, tn, in_itemsize, out_itemsize, self._cores)

        cost = pl.CostEstimate(
            flops=2 * n * ic * oc,
            transcendentals=0,
            bytes_accessed=(n * ic * in_itemsize + n * oc * out_itemsize
                            + k * oc_p * w_itemsize + oc_p * 4),
        )
        yp = _pallas_linear(xk, w, b, out_dtype, tm=tm, tn=tn,
                            vmem_limit=self._vmem_limit, cost=cost)
        return yp.reshape(n, oc)                # free row-major view back

    def __call__(self, inputs):
        if not self.reduce_dim:
            return inputs
        lead = inputs.shape[:-1]
        ic = inputs.shape[-1]
        x2d = inputs.reshape(-1, ic)  # same element order as the PyTorch reshape
        n = x2d.shape[0]
        if n < self.min_rows_for_pallas:
            y2d = x2d @ self.weight_t + self.bias  # tiny-batch fallback
        else:
            y2d = self._pallas_forward(x2d)
        return y2d.reshape(*lead, self.output_dim)


if __name__ == "__main__":
    key = jax.random.PRNGKey(0)
    k4, k3, kb = jax.random.split(key, 3)

    feature_dim, output_dim = 128, 64
    model = PreExtractedFeatures(feature_dim, output_dim)

    # 4D path (BS, D2, FR, IC); N = 102 -> pack=2 path with a ragged row block.
    x4 = jax.random.normal(k4, (2, 3, 17, feature_dim), jnp.float32)
    y4 = jax.block_until_ready(model(x4))
    assert y4.shape == (2, 3, 17, output_dim)
    ref4 = (x4.reshape(-1, feature_dim) @ model.weight_t + model.bias).reshape(
        2, 3, 17, output_dim)
    assert jnp.allclose(y4, ref4, atol=1e-4, rtol=1e-4), "4D mismatch"

    # 3D path (BS, FR, IC); N = 99 (odd -> unpacked path, ragged row block).
    x3 = jax.random.normal(k3, (3, 33, feature_dim), jnp.float32)
    y3 = jax.block_until_ready(model(x3))
    assert y3.shape == (3, 33, output_dim)
    ref3 = (x3.reshape(-1, feature_dim) @ model.weight_t + model.bias).reshape(
        3, 33, output_dim)
    assert jnp.allclose(y3, ref3, atol=1e-4, rtol=1e-4), "3D mismatch"

    # Opt-in bf16 activation/weight path (f32 MXU accumulation); looser tolerance.
    model_bf16 = PreExtractedFeatures(feature_dim, output_dim, use_bf16=True)
    xb = jax.random.normal(kb, (2, 2, 16, feature_dim), jnp.float32)
    yb = jax.block_until_ready(model_bf16(xb))
    refb = (xb.reshape(-1, feature_dim) @ model_bf16.weight_t + model_bf16.bias).reshape(
        2, 2, 16, output_dim)
    assert yb.shape == refb.shape
    assert jnp.allclose(yb, refb, atol=5e-2, rtol=5e-2), "bf16 mismatch"

    # Identity path (feature_dim == output_dim): passthrough, no Linear.
    ident = PreExtractedFeatures(feature_dim, feature_dim)
    z = ident(x3)
    assert z is x3

    print("KERNEL_OK")
</pallas_src>

<mosaic_0001>
module attributes {stable_mosaic.version = 11 : i64} {
  func.func @_linear_kernel(%arg0: i32, %arg1: i32, %arg2: memref<56x256xf32, #tpu.memory_space<vmem>>, %arg3: memref<256x128xf32, #tpu.memory_space<vmem>>, %arg4: memref<1x128xf32, #tpu.memory_space<vmem>>, %arg5: memref<56x128xf32, #tpu.memory_space<vmem>>) attributes {dimension_semantics = [#tpu.dimension_semantics<parallel>, #tpu.dimension_semantics<parallel>], iteration_bounds = array<i64: 1, 1>, scalar_prefetch = 0 : i64, scratch_operands = 0 : i64, tpu.core_type = #tpu.core_type<tc>, window_params = [{transform_indices = @transform_0, window_bounds = array<i64: 56, 256>}, {transform_indices = @transform_1, window_bounds = array<i64: 256, 128>}, {transform_indices = @transform_2, window_bounds = array<i64: 1, 128>}, {transform_indices = @transform_3, window_bounds = array<i64: 56, 128>}]} {
    %c0 = arith.constant 0 : index
    %c0_0 = arith.constant 0 : index
    %0 = vector.load %arg2[%c0, %c0_0] : memref<56x256xf32, #tpu.memory_space<vmem>>, vector<56x256xf32>
    %c0_1 = arith.constant 0 : index
    %c0_2 = arith.constant 0 : index
    %1 = vector.load %arg3[%c0_1, %c0_2] : memref<256x128xf32, #tpu.memory_space<vmem>>, vector<256x128xf32>
    %cst = arith.constant dense<0.000000e+00> : vector<56x128xf32>
    %2 = tpu.matmul %0, %1, %cst {dimension_numbers = #tpu.dot_dimension_numbers<[1], [0], [0], [1], [0, 0, 1, 1], [], []>} : vector<56x256xf32>, vector<256x128xf32>, vector<56x128xf32> -> vector<56x128xf32>
    %c0_3 = arith.constant 0 : index
    %c0_4 = arith.constant 0 : index
    %3 = vector.load %arg4[%c0_3, %c0_4] : memref<1x128xf32, #tpu.memory_space<vmem>>, vector<1x128xf32>
    %4 = vector.broadcast %3 : vector<1x128xf32> to vector<56x128xf32>
    %5 = arith.addf %2, %4 : vector<56x128xf32>
    %c0_5 = arith.constant 0 : index
    %c0_6 = arith.constant 0 : index
    %6 = vector.load %arg5[%c0_5, %c0_6] : memref<56x128xf32, #tpu.memory_space<vmem>>, vector<56x128xf32>
    tpu.vector_store %arg5[%c0_5, %c0_6], %5 {strides = array<i32>} : memref<56x128xf32, #tpu.memory_space<vmem>>, vector<56x128xf32>,
    return
  }
  func.func @transform_0(%arg0: i32, %arg1: i32) -> (i32, i32) {
    %c0_i32 = arith.constant 0 : i32
    %c0_i32_0 = arith.constant 0 : i32
    return %arg0, %c0_i32 : i32, i32
  }
  func.func @transform_1(%arg0: i32, %arg1: i32) -> (i32, i32) {
    %c0_i32 = arith.constant 0 : i32
    %c0_i32_0 = arith.constant 0 : i32
    return %c0_i32, %arg1 : i32, i32
  }
  func.func @transform_2(%arg0: i32, %arg1: i32) -> (i32, i32) {
    %c0_i32 = arith.constant 0 : i32
    %c0_i32_0 = arith.constant 0 : i32
    return %c0_i32, %arg1 : i32, i32
  }
  func.func @transform_3(%arg0: i32, %arg1: i32) -> (i32, i32) {
    %c0_i32 = arith.constant 0 : i32
    return %arg0, %arg1 : i32, i32
  }
}

</mosaic_0001>

<llo_original>
// kernel: tpu_custom_call.1
$region0: #{tpu_custom_call.1}
  #allocation0 [shape = 'u32[]', space=smem, size = 0x4, offset = 0x4, fixed_abs, tag = 'smem constant byte address 0x4 - core index']
  #allocation1 [shape = 'u32[144,128]{1,0:T(1,128)}', space=vmem, size = 0x12000, scoped, tag = 'internal scratch']
  %s0 = inlined_call_operand.hbm [shape: f32[51,256], index: 0, kind: input, shape index: {}]
  %s1 = inlined_call_operand.hbm [shape: f32[256,128], index: 1, kind: input, shape index: {}]
  %s2 = inlined_call_operand.vmem [shape: f32[1,128], index: 2, kind: input, shape index: {}]
  %s3 = inlined_call_operand.hbm [shape: f32[51,128], index: 3, kind: output, shape index: {}]
  %s4 = sld [smem:[#allocation0]]
  $region30: #{tpu_custom_call.1} parent=0
    _
  %s6 = ssub.s32 1, %s4
  %s7 = scalar_select 0, %s6, %s4
  $region1: #{tpu_custom_call.1} parent=0
    #allocation2 [shape = 'u8[57344]{0}', space=vmem, size = 0xe000, scoped, tag = 'input window, operand 0, single buffered']
    #allocation3 [shape = 's32[1]{0}', space=sflag, size = 0x4, scoped, tag = 'scoped memory for tpu_custom_call.1']
    #allocation4 [shape = 's32[1]{0}', space=sflag, size = 0x4, scoped, tag = 'scoped memory for tpu_custom_call.1']
    #allocation5 [shape = 'u8[131072]{0}', space=vmem, size = 0x20000, scoped, tag = 'input window, operand 1, single buffered']
    #allocation6 [shape = 's32[1]{0}', space=sflag, size = 0x4, scoped, tag = 'scoped memory for tpu_custom_call.1']
    #allocation7 [shape = 'u8[28672]{0}', space=vmem, size = 0x7000, scoped, tag = 'output window, operand 0, single buffered']
    %8 = vsyncpa [#allocation3], 0
    %9 = vsyncpa [#allocation6], 0
    %10 = vsyncpa [#allocation4], 0
    // Predicated region
    $region2: #{tpu_custom_call.1} parent=1 // pred_check
      _
    $region3: #{tpu_custom_call.1} parent=1 // pred_check_branch
      %12 = sbr.rel (0) target = $region5
    $region4: #{tpu_custom_call.1} parent=1 // pred_region
      %s14 = ssub.s32 1792, 1792
      %15 = vsyncadd [#allocation3], %s14
      %s16 = sshll.u32 [#allocation2], 4
      %s17 = int_to_ptr.vmem [resolvable:$true] %s16
      %22 = dma.hbm_to_vmem [thread:$0]  %s0, 1792, %s17, [#allocation3], 256, 256, 16
    $region5: #{tpu_custom_call.1} parent=1 // pred_fallthru
      _
    // Predicated region
    $region6: #{tpu_custom_call.1} parent=1 // pred_check
      _
    $region7: #{tpu_custom_call.1} parent=1 // pred_check_branch
      %24 = sbr.rel (0) target = $region9
    $region8: #{tpu_custom_call.1} parent=1 // pred_region
      %s26 = ssub.s32 4096, 4096
      %27 = vsyncadd [#allocation6], %s26
      %s28 = sshll.u32 [#allocation5], 4
      %s29 = int_to_ptr.vmem [resolvable:$true] %s28
      %34 = dma.hbm_to_vmem [thread:$0]  %s1, 4096, %s29, [#allocation6], 128, 128, 8
    $region9: #{tpu_custom_call.1} parent=1 // pred_fallthru
      _
    // Predicated region
    $region10: #{tpu_custom_call.1} parent=1 // pred_check
      _
    $region11: #{tpu_custom_call.1} parent=1 // pred_check_branch
      %36 = sbr.rel (0) target = $region13
    $region12: #{tpu_custom_call.1} parent=1 // pred_region
      _
    $region13: #{tpu_custom_call.1} parent=1 // pred_fallthru
      _
    // Predicated region
    $region14: #{tpu_custom_call.1} parent=1 // pred_check
      _
    $region15: #{tpu_custom_call.1} parent=1 // pred_check_branch
      %38 = sbr.rel (0) target = $region17
    $region16: #{tpu_custom_call.1} parent=1 // pred_region
      %39 = dma.done [#allocation3], 1792
    $region17: #{tpu_custom_call.1} parent=1 // pred_fallthru
      _
    // Predicated region
    $region18: #{tpu_custom_call.1} parent=1 // pred_check
      _
    $region19: #{tpu_custom_call.1} parent=1 // pred_check_branch
      %41 = sbr.rel (0) target = $region21
    $region20: #{tpu_custom_call.1} parent=1 // pred_region
      %42 = dma.done [#allocation6], 4096
    $region21: #{tpu_custom_call.1} parent=1 // pred_fallthru
      _
    %v43 = vld [vmem:[#allocation2] sm:$0xff]
    %v44 = vld [vmem:[#allocation2 + $0x8] sm:$0xff]
    %v45 = vld [vmem:[#allocation2 + $0x10] sm:$0xff]
    %v46 = vld [vmem:[#allocation2 + $0x18] sm:$0xff]
    %v47 = vld [vmem:[#allocation2 + $0x20] sm:$0xff]
    %v48 = vld [vmem:[#allocation2 + $0x28] sm:$0xff]
    %v49 = vld [vmem:[#allocation2 + $0x30] sm:$0xff]
    %v50 = vld [vmem:[#allocation2 + $0x38] sm:$0xff]
    %v51 = vld [vmem:[#allocation2 + $0x40] sm:$0xff]
    %v52 = vld [vmem:[#allocation2 + $0x48] sm:$0xff]
    %v53 = vld [vmem:[#allocation2 + $0x50] sm:$0xff]
    %v54 = vld [vmem:[#allocation2 + $0x58] sm:$0xff]
    %v55 = vld [vmem:[#allocation2 + $0x60] sm:$0xff]
    %v56 = vld [vmem:[#allocation2 + $0x68] sm:$0xff]
    %v57 = vld [vmem:[#allocation5] sm:$0xff]
    %v58 = vld [vmem:[#allocation5 + $0x8] sm:$0xff]
    %v59 = vld [vmem:[#allocation5 + $0x10] sm:$0xff]
    %v60 = vld [vmem:[#allocation5 + $0x18] sm:$0xff]
    %v61 = vld [vmem:[#allocation5 + $0x20] sm:$0xff]
    %v62 = vld [vmem:[#allocation5 + $0x28] sm:$0xff]
    %v63 = vld [vmem:[#allocation5 + $0x30] sm:$0xff]
    %v64 = vld [vmem:[#allocation5 + $0x38] sm:$0xff]
    %v65 = vld [vmem:[#allocation5 + $0x40] sm:$0xff]
    %v66 = vld [vmem:[#allocation5 + $0x48] sm:$0xff]
    %v67 = vld [vmem:[#allocation5 + $0x50] sm:$0xff]
    %v68 = vld [vmem:[#allocation5 + $0x58] sm:$0xff]
    %v69 = vld [vmem:[#allocation5 + $0x60] sm:$0xff]
    %v70 = vld [vmem:[#allocation5 + $0x68] sm:$0xff]
    %v71 = vld [vmem:[#allocation5 + $0x70] sm:$0xff]
    %v72 = vld [vmem:[#allocation5 + $0x78] sm:$0xff]
    %v73 = vld [vmem:[#allocation5 + $0x80] sm:$0xff]
    %v74 = vld [vmem:[#allocation5 + $0x88] sm:$0xff]
    %v75 = vld [vmem:[#allocation5 + $0x90] sm:$0xff]
    %v76 = vld [vmem:[#allocation5 + $0x98] sm:$0xff]
    %v77 = vld [vmem:[#allocation5 + $0xa0] sm:$0xff]
    %v78 = vld [vmem:[#allocation5 + $0xa8] sm:$0xff]
    %v79 = vld [vmem:[#allocation5 + $0xb0] sm:$0xff]
    %v80 = vld [vmem:[#allocation5 + $0xb8] sm:$0xff]
    %v81 = vld [vmem:[#allocation5 + $0xc0] sm:$0xff]
    %v82 = vld [vmem:[#allocation5 + $0xc8] sm:$0xff]
    %v83 = vld [vmem:[#allocation5 + $0xd0] sm:$0xff]
    %v84 = vld [vmem:[#allocation5 + $0xd8] sm:$0xff]
    %v85 = vld [vmem:[#allocation5 + $0xe0] sm:$0xff]
    %v86 = vld [vmem:[#allocation5 + $0xe8] sm:$0xff]
    %v87 = vld [vmem:[#allocation5 + $0xf0] sm:$0xff]
    %v88 = vld [vmem:[#allocation5 + $0xf8] sm:$0xff]
    %v89 = vld [vmem:[%s2] sm:$0x1]
    %v91 = vlaneseq
    %v92 = vshrl.u32 %v91, 7
    %v93 = vsub.s32 0, %v92
    %v94 = vrot.slane %v89, %v93
    %96 = vmatprep.subr.mxu0 0.0
    %97 = vmatpush1.msra.mxu0 %v57
    %98 = vmatprep.subr.mxu0 0.0
    %99 = vmatpush1.msra.mxu0 %v58
    %100 = vmatprep.subr.mxu0 0.0
    %101 = vmatpush1.msra.mxu0 %v59
    %102 = vmatprep.subr.mxu0 0.0
    %103 = vmatpush1.msra.mxu0 %v60
    %104 = vmatprep.subr.mxu0 0.0
    %105 = vmatpush1.msra.mxu0 %v61
    %106 = vmatprep.subr.mxu0 0.0
    %107 = vmatpush1.msra.mxu0 %v62
    %108 = vmatprep.subr.mxu0 0.0
    %109 = vmatpush1.msra.mxu0 %v63
    %110 = vmatprep.subr.mxu0 0.0
    %111 = vmatpush1.msra.mxu0 %v64
    %112 = vmatprep.subr.mxu0 0.0
    %113 = vmatpush1.msra.mxu0 %v65
    %114 = vmatprep.subr.mxu0 0.0
    %115 = vmatpush1.msra.mxu0 %v66
    %116 = vmatprep.subr.mxu0 0.0
    %117 = vmatpush1.msra.mxu0 %v67
    %118 = vmatprep.subr.mxu0 0.0
    %119 = vmatpush1.msra.mxu0 %v68
    %120 = vmatprep.subr.mxu0 0.0
    %121 = vmatpush1.msra.mxu0 %v69
    %122 = vmatprep.subr.mxu0 0.0
    %123 = vmatpush1.msra.mxu0 %v70
    %124 = vmatprep.subr.mxu0 0.0
    %125 = vmatpush1.msra.mxu0 %v71
    %126 = vmatprep.subr.mxu0 0.0
    %127 = vmatpush1.msra.mxu0 %v72
    %128 = vmatprep.subr.mxu0 0.0
    %129 = vmatpush1.msra.mxu0 %v73
    %130 = vmatprep.subr.mxu0 0.0
    %131 = vmatpush1.msra.mxu0 %v74
    %132 = vmatprep.subr.mxu0 0.0
    %133 = vmatpush1.msra.mxu0 %v75
    %134 = vmatprep.subr.mxu0 0.0
    %135 = vmatpush1.msra.mxu0 %v76
    %136 = vmatprep.subr.mxu0 0.0
    %137 = vmatpush1.msra.mxu0 %v77
    %138 = vmatprep.subr.mxu0 0.0
    %139 = vmatpush1.msra.mxu0 %v78
    %140 = vmatprep.subr.mxu0 0.0
    %141 = vmatpush1.msra.mxu0 %v79
    %142 = vmatprep.subr.mxu0 0.0
    %143 = vmatpush1.msra.mxu0 %v80
    %144 = vmatprep.subr.mxu0 0.0
    %145 = vmatpush1.msra.mxu0 %v81
    %146 = vmatprep.subr.mxu0 0.0
    %147 = vmatpush1.msra.mxu0 %v82
    %148 = vmatprep.subr.mxu0 0.0
    %149 = vmatpush1.msra.mxu0 %v83
    %150 = vmatprep.subr.mxu0 0.0
    %151 = vmatpush1.msra.mxu0 %v84
    %152 = vmatprep.subr.mxu0 0.0
    %153 = vmatpush1.msra.mxu0 %v85
    %154 = vmatprep.subr.mxu0 0.0
    %155 = vmatpush1.msra.mxu0 %v86
    %156 = vmatprep.subr.mxu0 0.0
    %157 = vmatpush1.msra.mxu0 %v87
    %158 = vmatprep.subr.mxu0 0.0
    %159 = vmatpush1.msra.mxu0 %v88
    %160 = vmatprep.mubr.f32.mxu0 %v44
    %161 = vmatmul.mubr.f32.gmra.mrb[0].mxu0 %v43
    %v162 = vpop.f32.mrb[0].mxu0
    %v163 = vadd.f32 %v94, %v162
    %v164 = vpop.f32.mrb[0].mxu0
    %165 = vmatprep.mubr.f32.mxu0 %v46
    %166 = vmatmul.mubr.f32.gmra.mrb[0].mxu0 %v45
    %v167 = vpop.f32.mrb[0].mxu0
    %v168 = vadd.f32 %v94, %v167
    %v169 = vpop.f32.mrb[0].mxu0
    %170 = vmatprep.mubr.f32.mxu0 %v48
    %171 = vmatmul.mubr.f32.gmra.mrb[0].mxu0 %v47
    %v172 = vpop.f32.mrb[0].mxu0
    %v173 = vadd.f32 %v94, %v172
    %v174 = vpop.f32.mrb[0].mxu0
    %175 = vmatprep.mubr.f32.mxu0 %v50
    %176 = vmatmul.mubr.f32.gmra.mrb[0].mxu0 %v49
    %v177 = vpop.f32.mrb[0].mxu0
    %v178 = vadd.f32 %v94, %v177
    %v179 = vpop.f32.mrb[0].mxu0
    %180 = vmatprep.mubr.f32.mxu0 %v52
    %181 = vmatmul.mubr.f32.gmra.mrb[0].mxu0 %v51
    %v182 = vpop.f32.mrb[0].mxu0
    %v183 = vadd.f32 %v94, %v182
    %v184 = vpop.f32.mrb[0].mxu0
    %185 = vmatprep.mubr.f32.mxu0 %v54
    %186 = vmatmul.mubr.f32.gmra.mrb[0].mxu0 %v53
    %v187 = vpop.f32.mrb[0].mxu0
    %v188 = vadd.f32 %v94, %v187
    %v189 = vpop.f32.mrb[0].mxu0
    %190 = vmatprep.mubr.f32.mxu0 %v56
    %191 = vmatmul.mubr.f32.gmra.mrb[0].mxu0 %v55
    %v192 = vpop.f32.mrb[0].mxu0
    %v193 = vadd.f32 %v94, %v192
    %v194 = vpop.f32.mrb[0].mxu0
    %195 = vdwg.mxu0
    %196 = vst [vmem:[#allocation7] sm:$0xff] %v163
    %197 = vst [vmem:[#allocation7 + $0x8] sm:$0xff] %v168
    %198 = vst [vmem:[#allocation7 + $0x10] sm:$0xff] %v173
    %199 = vst [vmem:[#allocation7 + $0x18] sm:$0xff] %v178
    %200 = vst [vmem:[#allocation7 + $0x20] sm:$0xff] %v183
    %201 = vst [vmem:[#allocation7 + $0x28] sm:$0xff] %v188
    %202 = vst [vmem:[#allocation7 + $0x30] sm:$0xff] %v193
    // Predicated region
    $region22: #{tpu_custom_call.1} parent=1 // pred_check
      _
    $region23: #{tpu_custom_call.1} parent=1 // pred_check_branch
      %204 = sbr.rel (0) target = $region25
    $region24: #{tpu_custom_call.1} parent=1 // pred_region
      %s206 = ssub.s32 896, 896
      %207 = vsyncadd [#allocation4], %s206
      %s208 = sshll.u32 [#allocation7], 4
      %s209 = int_to_ptr.vmem [resolvable:$true] %s208
      %214 = dma.vmem_to_hbm [thread:$0]  %s209, 896, %s3, [#allocation4], 128, 128, 8
    $region25: #{tpu_custom_call.1} parent=1 // pred_fallthru
      _
    // Predicated region
    $region26: #{tpu_custom_call.1} parent=1 // pred_check
      _
    $region27: #{tpu_custom_call.1} parent=1 // pred_check_branch
      %216 = sbr.rel (0) target = $region29
    $region28: #{tpu_custom_call.1} parent=1 // pred_region
      %217 = dma.done [#allocation4], 896
    $region29: #{tpu_custom_call.1} parent=1 // pred_fallthru
      _
    %218 = vsyncpa [#allocation3], 1
    %219 = vsyncpa [#allocation6], 1
    %220 = vsyncpa [#allocation4], 1

</llo_original>
